<compile_context>
chip_gen: v6e
topology: v6e:2x2x1
jax: 0.10.0
libtpu: 0.0.40
codegen_flags: <defaults>
</compile_context>

<pallas_src>
import functools

import jax
import jax.numpy as jnp
from jax import lax
from jax.experimental import pallas as pl
from jax.experimental.pallas import tpu as pltpu


_VMEM_LIMIT_BYTES = 48 * 1024 * 1024   # < v7x 64 MiB physical, fine on v5e/v6e


def _vmem_capacity_bytes():
    """Trace-time VMEM capacity query with a conservative fallback."""
    try:
        cap = int(pltpu.get_tpu_info().vmem_capacity_bytes)
        return min(max(cap, 16 * 1024 * 1024), 256 * 1024 * 1024)
    except Exception:
        return 64 * 1024 * 1024        # v7x per-core VMEM (smallest generation)


# ---------------------------------------------------------------------------
# Kernels
# ---------------------------------------------------------------------------
def _fused_kernel(x_ref, p_ref, o_ref, *, n_valid, eps):
    """Single-pass Dice for a VMEM-resident [N, E] slab (x read once from HBM).

    p_ref rows: 0 = gamma, 1 = beta, 2 = alpha.
    """
    x = x_ref[...].astype(jnp.float32)                       # (N, E)
    inv_n = jnp.float32(1.0 / n_valid)
    mean = jnp.sum(x, axis=0, keepdims=True) * inv_n         # (1, E)
    xc = x - mean
    var = jnp.sum(xc * xc, axis=0, keepdims=True) * inv_n    # biased variance
    inv_std = lax.rsqrt(var + eps)

    gamma = p_ref[0:1, :]
    beta = p_ref[1:2, :]
    alpha = p_ref[2:3, :]
    # sigmoid(z) = 0.5*tanh(0.5*z)+0.5 ; gate = alpha + p*(1-alpha)
    #   -> gate = c0 + c1*tanh(xc*a + b)   (constants folded)
    a = (0.5 * gamma) * inv_std
    b = 0.5 * beta
    c1 = 0.5 * (1.0 - alpha)
    c0 = alpha + c1
    gate = c0 + c1 * jnp.tanh(xc * a + b)
    o_ref[...] = (x * gate).astype(o_ref.dtype)


def _stats_kernel(x_ref, stats_ref, *, block_rows, n_inner, valid_rows,
                  need_mask):
    """Pass 1: sublane-parallel per-lane sum / sum-of-squares partials.

    Grid: (split, n).  stats block (16, TE) resident across the n sweep:
      rows 0-7  = partial sums       (one partial per sublane),
      rows 8-15 = partial sum(x*x).
    The tiny 8->1 cross-sublane reduce is done once in the wrapper.
    """
    @pl.when(pl.program_id(1) == 0)
    def _():
        stats_ref[...] = jnp.zeros_like(stats_ref)

    x = x_ref[...].astype(jnp.float32)                        # (TN, TE)
    if need_mask:                                             # ragged last tile
        row_blk = pl.program_id(0) * n_inner + pl.program_id(1)
        rows = row_blk * block_rows + lax.broadcasted_iota(
            jnp.int32, x.shape, 0)
        x = jnp.where(rows < valid_rows, x, 0.0)

    xr = x.reshape(block_rows // 8, 8, x.shape[1])
    stats_ref[0:8, :] += jnp.sum(xr, axis=0)
    stats_ref[8:16, :] += jnp.sum(xr * xr, axis=0)


def _apply_kernel(x_ref, c_ref, o_ref):
    """Pass 2: out = x * (c0 + c1*tanh(x*a + b)); c rows = [a, b, c0, c1]."""
    x = x_ref[...].astype(jnp.float32)
    a = c_ref[0:1, :]
    b = c_ref[1:2, :]
    c0 = c_ref[2:3, :]
    c1 = c_ref[3:4, :]
    gate = c0 + c1 * jnp.tanh(x * a + b)
    o_ref[...] = (x * gate).astype(o_ref.dtype)


# ---------------------------------------------------------------------------
# Wrapper
# ---------------------------------------------------------------------------
def _dice_2d(x2d, gamma, beta, alpha, eps, *, force_two_pass=False, tn=None):
    """Dice on an [N, E] slab; per-feature params are [E] vectors."""
    out_dtype = x2d.dtype
    N, E = x2d.shape
    gamma = gamma.astype(jnp.float32).reshape(E)
    beta = beta.astype(jnp.float32).reshape(E)
    alpha = alpha.astype(jnp.float32).reshape(E)

    vmem_cap = _vmem_capacity_bytes()
    x_f32_bytes = N * E * 4

    # ---- fused single-pass path: x resident in VMEM (1R + 1W of HBM) -------
    if (not force_two_pass) and x_f32_bytes <= vmem_cap // 20:
        pvec = jnp.stack([gamma, beta, alpha], axis=0)          # (3, E)
        kern = functools.partial(_fused_kernel, n_valid=N, eps=eps)
        return pl.pallas_call(
            kern,
            out_shape=jax.ShapeDtypeStruct((N, E), out_dtype),
            grid=(1,),
            in_specs=[pl.BlockSpec((N, E), lambda i: (0, 0)),
                      pl.BlockSpec((3, E), lambda i: (0, 0))],
            out_specs=pl.BlockSpec((N, E), lambda i: (0, 0)),
            compiler_params=pltpu.CompilerParams(
                dimension_semantics=("arbitrary",),
                vmem_limit_bytes=_VMEM_LIMIT_BYTES),
        )(x2d, pvec)

    # ---- lane-dense fold only when it is a FREE contiguous reshape ---------
    if E % 128 == 0:
        k = 1
    elif 128 % E == 0 and N % (128 // E) == 0:
        k = 128 // E
    else:
        k = 1                       # keep E as-is; never pad/copy x in HBM
    x = x2d.reshape(N // k, k * E) if k > 1 else x2d
    NR, EL = x.shape

    # ---- tiling: TE = EL (contiguous DMAs), TN ~ 2 MiB f32 row tiles --------
    if tn is None:
        tn = max(8, (min(2048, (2 * 1024 * 1024) // (4 * EL)) // 8) * 8)
    TN = min(tn, max(8, (-(-NR // 8)) * 8))
    assert TN % 8 == 0
    n_nt = -(-NR // TN)                       # cdiv: number of row tiles
    ragged = (NR % TN) != 0
    # Split the stats sweep across two cores (v7x megacore) when clean.
    n_split = 2 if (n_nt % 2 == 0 and n_nt >= 2) else 1
    n_inner = n_nt // n_split

    # ---- pass 1: per-lane partial sums / sums-of-squares --------------------
    stats_kern = functools.partial(
        _stats_kernel, block_rows=TN, n_inner=n_inner,
        valid_rows=NR, need_mask=ragged)
    stats = pl.pallas_call(
        stats_kern,
        out_shape=jax.ShapeDtypeStruct((16 * n_split, EL), jnp.float32),
        grid=(n_split, n_inner),
        in_specs=[pl.BlockSpec((TN, EL), lambda s, n: (s * n_inner + n, 0))],
        out_specs=pl.BlockSpec((16, EL), lambda s, n: (s, 0)),
        compiler_params=pltpu.CompilerParams(
            dimension_semantics=("parallel", "arbitrary"),
            vmem_limit_bytes=_VMEM_LIMIT_BYTES),
    )(x)

    # ---- tiny host-side reduction + BN fold ---------------------------------
    stats = stats.reshape(n_split, 2, 8, EL)
    s_lane = jnp.sum(stats[:, 0], axis=(0, 1))                # (EL,)
    sq_lane = jnp.sum(stats[:, 1], axis=(0, 1))
    if k > 1:
        s_feat = s_lane.reshape(k, E).sum(axis=0)
        sq_feat = sq_lane.reshape(k, E).sum(axis=0)
    else:
        s_feat, sq_feat = s_lane, sq_lane

    inv_n = 1.0 / N
    mean = s_feat * inv_n
    # TODO(synk): E[x^2]-mean^2 in f32 can cancel when |mean| >> std; a shifted
    # (first-tile-mean) accumulation would be more robust for such data.
    var = jnp.maximum(sq_feat * inv_n - mean * mean, 0.0)
    inv_std = lax.rsqrt(var + eps)
    scale = inv_std * gamma                    # BN folded to scale/shift
    shift = beta - mean * scale
    a_v = 0.5 * scale                          # gate = c0 + c1*tanh(x*a + b)
    b_v = 0.5 * shift
    c1_v = 0.5 * (1.0 - alpha)
    c0_v = alpha + c1_v
    coefs = jnp.stack([a_v, b_v, c0_v, c1_v], axis=0)          # (4, E)
    if k > 1:
        coefs = jnp.tile(coefs, (1, k))                        # lane layout

    # ---- pass 2: elementwise gate, fully parallel ----------------------------
    out = pl.pallas_call(
        _apply_kernel,
        out_shape=jax.ShapeDtypeStruct((NR, EL), out_dtype),
        grid=(n_nt,),
        in_specs=[pl.BlockSpec((TN, EL), lambda i: (i, 0)),
                  pl.BlockSpec((4, EL), lambda i: (0, 0))],
        out_specs=pl.BlockSpec((TN, EL), lambda i: (i, 0)),
        compiler_params=pltpu.CompilerParams(
            dimension_semantics=("parallel",),
            vmem_limit_bytes=_VMEM_LIMIT_BYTES),
    )(x, coefs)

    if k > 1:
        out = out.reshape(N, E)                # free contiguous reshape back
    return out


def dice_forward(x, alpha, gamma, beta, *, dim, eps=1e-8,
                 force_two_pass=False, tn=None):
    """JAX/Pallas equivalent of Dice.forward (training-mode BatchNorm1d)."""
    assert x.ndim == dim
    if dim == 2:
        return _dice_2d(x, gamma, beta, alpha, eps,
                        force_two_pass=force_two_pass, tn=tn)
    # dim == 3: [B, T, E]; BN1d over channel E with stats over B*T samples.
    B, T, E = x.shape
    out = _dice_2d(x.reshape(B * T, E), gamma, beta, alpha, eps,
                   force_two_pass=force_two_pass, tn=tn)
    return out.reshape(B, T, E)
    # TODO(synk): running_mean/running_var buffer updates (training-mode
    # BatchNorm1d side effect) are not materialized; forward output unaffected.


def _dice_reference(x, alpha, gamma, beta, *, dim, eps=1e-8):
    """Pure-JAX reference for correctness checking."""
    if dim == 3:
        B, T, E = x.shape
        x2 = x.reshape(B * T, E)
        a = alpha.reshape(E)
    else:
        x2, a = x, alpha
    mean = jnp.mean(x2, axis=0, keepdims=True)
    var = jnp.mean((x2 - mean) ** 2, axis=0, keepdims=True)
    xn = (x2 - mean) / jnp.sqrt(var + eps) * gamma + beta
    p = jax.nn.sigmoid(xn)
    out = a * (1.0 - p) * x2 + p * x2
    return out.reshape(x.shape)


if __name__ == "__main__":
    key = jax.random.PRNGKey(0)
    k1, k2, k3, k4, k5, k6, k7 = jax.random.split(key, 7)

    E = 32
    eps = 1e-8

    # Parameters exactly as the module's __init__ (deterministic):
    #   BatchNorm1d: gamma = ones(E), beta = zeros(E); alpha = zeros.
    gamma0 = jnp.ones((E,), jnp.float32)
    beta0 = jnp.zeros((E,), jnp.float32)
    alpha2 = jnp.zeros((E,), jnp.float32)
    alpha3 = jnp.zeros((E, 1), jnp.float32)

    f2 = jax.jit(functools.partial(dice_forward, dim=2, eps=eps))
    f3 = jax.jit(functools.partial(dice_forward, dim=3, eps=eps))

    # dim == 2: x [batch, emb]  (fused VMEM-resident path)
    x2 = jax.random.normal(k1, (8, E), jnp.float32)
    out2 = jax.block_until_ready(f2(x2, alpha2, gamma0, beta0))
    ref2 = _dice_reference(x2, alpha2, gamma0, beta0, dim=2, eps=eps)
    assert bool(jnp.allclose(out2, ref2, rtol=1e-5, atol=1e-5))

    # dim == 3: x [batch, num_features, emb]  (fused path, alpha shape (E,1))
    x3 = jax.random.normal(k2, (2, 6, E), jnp.float32)
    out3 = jax.block_until_ready(f3(x3, alpha3, gamma0, beta0))
    ref3 = _dice_reference(x3, alpha3, gamma0, beta0, dim=3, eps=eps)
    assert bool(jnp.allclose(out3, ref3, rtol=1e-5, atol=1e-5))

    # Two-pass tiled path with non-default params and a ragged last row tile
    # (exercises the in-kernel mask; folded layout 4100x32 -> 1025x128).
    gamma_r = 1.0 + 0.1 * jax.random.normal(k3, (E,), jnp.float32)
    beta_r = 0.1 * jax.random.normal(k4, (E,), jnp.float32)
    alpha_r = 0.5 * jax.random.normal(k5, (E,), jnp.float32)
    f2p = jax.jit(functools.partial(dice_forward, dim=2, eps=eps,
                                    force_two_pass=True, tn=256))
    xa = jax.random.normal(k6, (4100, E), jnp.float32)
    outa = jax.block_until_ready(f2p(xa, alpha_r, gamma_r, beta_r))
    refa = _dice_reference(xa, alpha_r, gamma_r, beta_r, dim=2, eps=eps)
    assert bool(jnp.allclose(outa, refa, rtol=1e-4, atol=1e-4))

    # Two-pass tiled path with an even tile count (stats sweep split across
    # two cores via the leading parallel grid axis).
    xb = jax.random.normal(k7, (4096, E), jnp.float32)
    outb = jax.block_until_ready(f2p(xb, alpha_r, gamma_r, beta_r))
    refb = _dice_reference(xb, alpha_r, gamma_r, beta_r, dim=2, eps=eps)
    assert bool(jnp.allclose(outb, refb, rtol=1e-4, atol=1e-4))

    print("KERNEL_OK")
</pallas_src>

<mosaic_0001>
module attributes {stable_mosaic.version = 11 : i64} {
  func.func @_fused_kernel(%arg0: i32, %arg1: memref<8x32xf32, #tpu.memory_space<vmem>>, %arg2: memref<3x32xf32, #tpu.memory_space<vmem>>, %arg3: memref<8x32xf32, #tpu.memory_space<vmem>>) attributes {dimension_semantics = [#tpu.dimension_semantics<arbitrary>], iteration_bounds = array<i64: 1>, scalar_prefetch = 0 : i64, scratch_operands = 0 : i64, tpu.core_type = #tpu.core_type<tc>, window_params = [{pipeline_mode = #tpu.pipeline_mode<synchronous>, transform_indices = @transform_0, window_bounds = array<i64: 8, 32>}, {pipeline_mode = #tpu.pipeline_mode<synchronous>, transform_indices = @transform_1, window_bounds = array<i64: 3, 32>}, {pipeline_mode = #tpu.pipeline_mode<synchronous>, transform_indices = @transform_2, window_bounds = array<i64: 8, 32>}]} {
    %c0 = arith.constant 0 : index
    %c0_0 = arith.constant 0 : index
    %0 = vector.load %arg1[%c0, %c0_0] : memref<8x32xf32, #tpu.memory_space<vmem>>, vector<8x32xf32>
    %cst = arith.constant dense<0.000000e+00> : vector<32xf32>
    %1 = vector.multi_reduction <add>, %0, %cst [0] : vector<8x32xf32> to vector<32xf32>
    %2 = vector.shape_cast %1 : vector<32xf32> to vector<1x32xf32>
    %cst_1 = arith.constant 1.250000e-01 : f32
    %3 = vector.broadcast %cst_1 : f32 to vector<1x32xf32>
    %4 = arith.mulf %2, %3 : vector<1x32xf32>
    %5 = vector.broadcast %4 : vector<1x32xf32> to vector<8x32xf32>
    %6 = arith.subf %0, %5 : vector<8x32xf32>
    %7 = arith.mulf %6, %6 : vector<8x32xf32>
    %cst_2 = arith.constant dense<0.000000e+00> : vector<32xf32>
    %8 = vector.multi_reduction <add>, %7, %cst_2 [0] : vector<8x32xf32> to vector<32xf32>
    %9 = vector.shape_cast %8 : vector<32xf32> to vector<1x32xf32>
    %cst_3 = arith.constant 1.250000e-01 : f32
    %10 = vector.broadcast %cst_3 : f32 to vector<1x32xf32>
    %11 = arith.mulf %9, %10 : vector<1x32xf32>
    %cst_4 = arith.constant 9.99999993E-9 : f32
    %12 = vector.broadcast %cst_4 : f32 to vector<1x32xf32>
    %13 = arith.addf %11, %12 : vector<1x32xf32>
    %14 = math.rsqrt %13 : vector<1x32xf32>
    %c0_5 = arith.constant 0 : index
    %c0_6 = arith.constant 0 : index
    %15 = vector.load %arg2[%c0_5, %c0_6] : memref<3x32xf32, #tpu.memory_space<vmem>>, vector<1x32xf32>
    %c1 = arith.constant 1 : index
    %c0_7 = arith.constant 0 : index
    %16 = vector.load %arg2[%c1, %c0_7] : memref<3x32xf32, #tpu.memory_space<vmem>>, vector<1x32xf32>
    %c2 = arith.constant 2 : index
    %c0_8 = arith.constant 0 : index
    %17 = vector.load %arg2[%c2, %c0_8] : memref<3x32xf32, #tpu.memory_space<vmem>>, vector<1x32xf32>
    %cst_9 = arith.constant 5.000000e-01 : f32
    %18 = vector.broadcast %cst_9 : f32 to vector<1x32xf32>
    %19 = arith.mulf %18, %15 : vector<1x32xf32>
    %20 = arith.mulf %19, %14 : vector<1x32xf32>
    %cst_10 = arith.constant 5.000000e-01 : f32
    %21 = vector.broadcast %cst_10 : f32 to vector<1x32xf32>
    %22 = arith.mulf %21, %16 : vector<1x32xf32>
    %cst_11 = arith.constant 1.000000e+00 : f32
    %23 = vector.broadcast %cst_11 : f32 to vector<1x32xf32>
    %24 = arith.subf %23, %17 : vector<1x32xf32>
    %cst_12 = arith.constant 5.000000e-01 : f32
    %25 = vector.broadcast %cst_12 : f32 to vector<1x32xf32>
    %26 = arith.mulf %25, %24 : vector<1x32xf32>
    %27 = arith.addf %17, %26 : vector<1x32xf32>
    %28 = vector.broadcast %20 : vector<1x32xf32> to vector<8x32xf32>
    %29 = arith.mulf %6, %28 : vector<8x32xf32>
    %30 = vector.broadcast %22 : vector<1x32xf32> to vector<8x32xf32>
    %31 = arith.addf %29, %30 : vector<8x32xf32>
    %32 = math.tanh %31 : vector<8x32xf32>
    %33 = vector.broadcast %26 : vector<1x32xf32> to vector<8x32xf32>
    %34 = arith.mulf %33, %32 : vector<8x32xf32>
    %35 = vector.broadcast %27 : vector<1x32xf32> to vector<8x32xf32>
    %36 = arith.addf %35, %34 : vector<8x32xf32>
    %37 = arith.mulf %0, %36 : vector<8x32xf32>
    %c0_13 = arith.constant 0 : index
    %c0_14 = arith.constant 0 : index
    %38 = vector.load %arg3[%c0_13, %c0_14] : memref<8x32xf32, #tpu.memory_space<vmem>>, vector<8x32xf32>
    tpu.vector_store %arg3[%c0_13, %c0_14], %37 {strides = array<i32>} : memref<8x32xf32, #tpu.memory_space<vmem>>, vector<8x32xf32>,
    return
  }
  func.func @transform_0(%arg0: i32) -> (i32, i32) {
    %c0_i32 = arith.constant 0 : i32
    %c0_i32_0 = arith.constant 0 : i32
    %c0_i32_1 = arith.constant 0 : i32
    return %c0_i32, %c0_i32_0 : i32, i32
  }
  func.func @transform_1(%arg0: i32) -> (i32, i32) {
    %c0_i32 = arith.constant 0 : i32
    %c0_i32_0 = arith.constant 0 : i32
    %c0_i32_1 = arith.constant 0 : i32
    return %c0_i32, %c0_i32_0 : i32, i32
  }
  func.func @transform_2(%arg0: i32) -> (i32, i32) {
    %c0_i32 = arith.constant 0 : i32
    %c0_i32_0 = arith.constant 0 : i32
    %c0_i32_1 = arith.constant 0 : i32
    return %c0_i32, %c0_i32_0 : i32, i32
  }
}

</mosaic_0001>

<llo_original>
// kernel: dice_forward.1
$region0: #{dice_forward.1}
  #allocation0 [shape = 'u32[]', space=smem, size = 0x4, offset = 0x4, fixed_abs, tag = 'smem constant byte address 0x4 - core index']
  #allocation1 [shape = 'u32[144,128]{1,0:T(1,128)}', space=vmem, size = 0x12000, scoped, tag = 'internal scratch']
  %s0 = inlined_call_operand.vmem [shape: f32[8,32], index: 0, kind: input, shape index: {}]
  %s1 = inlined_call_operand.vmem [shape: f32[3,32], index: 1, kind: input, shape index: {}]
  %s2 = inlined_call_operand.hbm [shape: f32[8,32], index: 2, kind: output, shape index: {}]
  %s3 = sld [smem:[#allocation0]]
  $region18: #{dice_forward.1} parent=0
    _
  %s5 = ssub.s32 1, %s3
  %s6 = scalar_select 0, %s5, %s3
  $region1: #{dice_forward.1} parent=0
    #allocation2 [shape = 'u8[4096]{0}', space=vmem, size = 0x1000, scoped, tag = 'output window, operand 0, single buffered']
    #allocation3 [shape = 's32[1]{0}', space=sflag, size = 0x4, scoped, tag = 'scoped memory for dice_forward.1']
    %7 = vsyncpa [#allocation3], 0
    // Predicated region
    $region2: #{dice_forward.1} parent=1 // pred_check
      _
    $region3: #{dice_forward.1} parent=1 // pred_check_branch
      %9 = sbr.rel (0) target = $region5
    $region4: #{dice_forward.1} parent=1 // pred_region
      _
    $region5: #{dice_forward.1} parent=1 // pred_fallthru
      _
    // Predicated region
    $region6: #{dice_forward.1} parent=1 // pred_check
      _
    $region7: #{dice_forward.1} parent=1 // pred_check_branch
      %11 = sbr.rel (0) target = $region9
    $region8: #{dice_forward.1} parent=1 // pred_region
      _
    $region9: #{dice_forward.1} parent=1 // pred_fallthru
      _
    %v12 = vld [vmem:[%s0] sm:$0xff]
    %vm13 = vcmask 261120
    %v14 = vsel %vm13, %v12, 0.0
    %v15 = vrot.slane %v14, 4
    %v16 = vadd.f32 %v14, %v15
    %v17 = vrot.slane %v16, 2
    %v18 = vadd.f32 %v16, %v17
    %v19 = vrot.slane %v18, 1
    %v20 = vadd.f32 %v18, %v19
    %v21 = vmul.f32 %v20, 0.125
    %v22 = vsub.f32 %v12, %v21
    %v23 = vmul.f32 %v22, %v22
    %v24 = vsel %vm13, %v23, 0.0
    %v25 = vrot.slane %v24, 4
    %v26 = vadd.f32 %v24, %v25
    %v27 = vrot.slane %v26, 2
    %v28 = vadd.f32 %v26, %v27
    %v29 = vrot.slane %v28, 1
    %v30 = vadd.f32 %v28, %v29
    %v31 = vmul.f32 %v30, 0.125
    %v32 = vadd.f32 %v31, 1e-08
    %v33 = vrsqrt.pop %v32
    %v34 = vld [vmem:[%s1] sm:$0x1]
    %v35 = vld [vmem:[%s1 + $0x1] sm:$0x1]
    %v36 = vld [vmem:[%s1 + $0x2] sm:$0x1]
    %v37 = vmul.f32 %v34, 0.5
    %v38 = vmul.f32 %v37, %v33
    %v39 = vmul.f32 %v35, 0.5
    %v40 = vsub.f32 1.0, %v36
    %v41 = vmul.f32 %v40, 0.5
    %v42 = vadd.f32 %v36, %v41
    %v43 = vlaneseq
    %v44 = vshrl.u32 %v43, 7
    %v45 = vsub.s32 0, %v44
    %v46 = vrot.slane %v38, %v45
    %v47 = vmul.f32 %v22, %v46
    %v48 = vlaneseq
    %v49 = vshrl.u32 %v48, 7
    %v50 = vsub.s32 0, %v49
    %v51 = vrot.slane %v39, %v50
    %v52 = vadd.f32 %v47, %v51
    %v53 = vtanh.pop %v52
    %v54 = vlaneseq
    %v55 = vshrl.u32 %v54, 7
    %v56 = vsub.s32 0, %v55
    %v57 = vrot.slane %v41, %v56
    %v58 = vmul.f32 %v57, %v53
    %v59 = vlaneseq
    %v60 = vshrl.u32 %v59, 7
    %v61 = vsub.s32 0, %v60
    %v62 = vrot.slane %v42, %v61
    %v63 = vadd.f32 %v62, %v58
    %v64 = vmul.f32 %v12, %v63
    %65 = vst.msk [vmem:[#allocation2] sm:$0xff] %vm13, %v64
    // Predicated region
    $region10: #{dice_forward.1} parent=1 // pred_check
      _
    $region11: #{dice_forward.1} parent=1 // pred_check_branch
      %67 = sbr.rel (0) target = $region13
    $region12: #{dice_forward.1} parent=1 // pred_region
      %s69 = ssub.s32 128, 128
      %70 = vsyncadd [#allocation3], %s69
      %s72 = sshll.u32 [#allocation2], 4
      %s73 = int_to_ptr.vmem [resolvable:$true] %s72
      %75 = dma.vmem_to_hbm [thread:$0]  %s73, 128, %s2, [#allocation3]
    $region13: #{dice_forward.1} parent=1 // pred_fallthru
      _
    // Predicated region
    $region14: #{dice_forward.1} parent=1 // pred_check
      _
    $region15: #{dice_forward.1} parent=1 // pred_check_branch
      %77 = sbr.rel (0) target = $region17
    $region16: #{dice_forward.1} parent=1 // pred_region
      %78 = dma.done [#allocation3], 128
    $region17: #{dice_forward.1} parent=1 // pred_fallthru
      _
    %79 = vsyncpa [#allocation3], 1

</llo_original>
